<compile_context>
chip_gen: v7x
topology: tpu7x:2x2x1
jax: 0.10.0
libtpu: 0.0.40
codegen_flags: <defaults>
</compile_context>

<pallas_src>
import functools

import jax
import jax.numpy as jnp
from jax import lax
from jax.experimental import pallas as pl
from jax.experimental.pallas import tpu as pltpu

ALPHA = 0.9
GAMMA = 2.0
_LANES = 128
_CHUNK = 32                       # accumulator rows: multiple of 8/16/32 (f32/bf16/int8 sublane packing)
_MAX_TM = 4096                    # keeps the unrolled chunk loop <= 128 adds
_DEFAULT_MIN_PALLAS_BYTES = 2 << 20   # below this, plain jnp.sum wins


@functools.lru_cache(maxsize=1)
def _chip_profile():
    """Per-generation per-step byte budget, scoped-VMEM limit and TensorCore split."""
    kind = ""
    try:
        kind = jax.devices()[0].device_kind.lower()
    except Exception:
        pass
    if "7x" in kind or "v7" in kind:
        # v7x: 64 MiB VMEM/TC -> cap scoped VMEM at 32 MiB; 2 TCs -> core-parallel split.
        return dict(target_bytes=4 << 20, vmem_limit=32 << 20,
                    num_splits=2, split_sem=pltpu.CORE_PARALLEL)
    if "v6" in kind:
        # v6e: single TC, 128 MiB VMEM -> big tiles, raise the scoped limit.
        return dict(target_bytes=4 << 20, vmem_limit=64 << 20,
                    num_splits=1, split_sem=pltpu.ARBITRARY)
    if "v4" in kind or ("v5" in kind and "lite" not in kind and "5e" not in kind):
        # Megacore chips (v4 / v5p): plain "parallel" shards the leading axis over 2 TCs.
        return dict(target_bytes=2 << 20, vmem_limit=32 << 20,
                    num_splits=2, split_sem=pltpu.PARALLEL)
    # v5e / unknown: conservative tiles.
    return dict(target_bytes=2 << 20, vmem_limit=32 << 20,
                num_splits=1, split_sem=pltpu.ARBITRARY)


def _sum_tiles_kernel(x_ref, out_ref, acc_ref, *, rows_total, tm, chunk, n_chunks,
                      mask_tail):
    c = pl.program_id(0)           # TensorCore / split index
    i = pl.program_id(1)           # row-tile index within the split
    gm = pl.num_programs(1)

    @pl.when(i == 0)
    def _init():
        acc_ref[...] = jnp.zeros_like(acc_ref)

    def _accum_full():
        # Steady state: pure VPU adds of aligned sublane slices, upcast in-kernel.
        for j in range(n_chunks):
            acc_ref[...] += x_ref[pl.ds(j * chunk, chunk), :].astype(jnp.float32)

    if mask_tail:
        blk = c * gm + i                      # logical (unclamped) row-block index
        rows_left = rows_total - blk * tm     # valid rows in this block (may be <= 0)

        @pl.when(rows_left >= tm)
        def _full():
            _accum_full()

        @pl.when(rows_left < tm)
        def _ragged():
            row_ids = lax.broadcasted_iota(jnp.int32, acc_ref.shape, 0)
            for j in range(n_chunks):
                xj = x_ref[pl.ds(j * chunk, chunk), :].astype(jnp.float32)
                valid = row_ids < (rows_left - j * chunk)
                acc_ref[...] += jnp.where(valid, xj, 0.0)
    else:
        _accum_full()

    @pl.when(i == gm - 1)
    def _finalize():
        # One cross-lane (XLU) reduce per split, in the epilogue only; lane-dense store.
        s = jnp.sum(acc_ref[...])
        out_ref[...] = jnp.broadcast_to(s.reshape(1, 1), out_ref.shape)


def _streaming_sum(x, *, min_pallas_bytes=_DEFAULT_MIN_PALLAS_BYTES):
    """sum(x) as an f32 scalar via a tiled, pipelined Pallas streaming reduction."""
    x = jnp.asarray(x)
    n = int(x.size)
    if n == 0:
        return jnp.zeros((), jnp.float32)

    itemsize = int(x.dtype.itemsize)
    # Tiny / non-float inputs: plain XLA is strictly faster and zero-risk.
    if (n * itemsize < min_pallas_bytes) or not jnp.issubdtype(x.dtype, jnp.floating):
        return jnp.sum(x, dtype=jnp.float32)

    # ---- Copy-free 2-D view (rows, cols): a reshape of contiguous row-major data. ----
    cols = None
    for cand in (2048, 1024, 512, 384, 256, 128):
        if n % cand == 0:
            cols = cand
            break
    if cols is None:
        last = int(x.shape[-1]) if x.ndim >= 1 else n
        if x.ndim >= 2 and 8 <= last <= 16384:
            cols = last                      # contiguous (rows, minor-dim) slabs
        else:
            return jnp.sum(x, dtype=jnp.float32)   # pathological layout: bail out
    rows = n // cols
    x2 = x.reshape(rows, cols)

    prof = _chip_profile()

    # ---- Row-tile: big enough to amortize ~0.35 us/step, small enough for VMEM. ----
    if rows <= _CHUNK:
        tm, chunk, n_chunks = rows, rows, 1
    else:
        budget_rows = max(_CHUNK,
                          (prof["target_bytes"] // (cols * itemsize)) // _CHUNK * _CHUNK)
        tm = min(budget_rows, _MAX_TM, (rows // _CHUNK) * _CHUNK)
        chunk = _CHUNK
        n_chunks = tm // _CHUNK

    n_blocks = pl.cdiv(rows, tm)
    num_splits = min(int(prof["num_splits"]), int(n_blocks))
    gm = pl.cdiv(n_blocks, num_splits)
    has_dup_blocks = (num_splits * gm != n_blocks)
    mask_tail = (rows % tm != 0) or has_dup_blocks

    def in_map(c, i):
        blk = c * gm + i
        if has_dup_blocks:
            blk = jnp.minimum(blk, n_blocks - 1)   # duplicate blocks are fully masked
        return (blk, 0)

    kernel = functools.partial(
        _sum_tiles_kernel, rows_total=rows, tm=tm, chunk=chunk,
        n_chunks=n_chunks, mask_tail=mask_tail)

    split_sem = prof["split_sem"] if num_splits > 1 else pltpu.ARBITRARY

    grid_spec = pltpu.PrefetchScalarGridSpec(
        num_scalar_prefetch=0,
        grid=(num_splits, gm),
        in_specs=[pl.BlockSpec((tm, cols), in_map)],
        out_specs=pl.BlockSpec((1, _LANES), lambda c, i: (c, 0)),
        scratch_shapes=[pltpu.VMEM((chunk, cols), jnp.float32)],
    )

    def _call(sem0):
        return pl.pallas_call(
            kernel,
            out_shape=jax.ShapeDtypeStruct((num_splits, _LANES), jnp.float32),
            grid_spec=grid_spec,
            compiler_params=pltpu.CompilerParams(
                dimension_semantics=(sem0, pltpu.ARBITRARY),
                vmem_limit_bytes=int(prof["vmem_limit"])),
            cost_estimate=pl.CostEstimate(
                flops=n, transcendentals=0,
                bytes_accessed=n * itemsize + num_splits * _LANES * 4),
        )(x2)

    try:
        psum = _call(split_sem)
    except Exception:
        # Safety net: if the core-parallel lowering is rejected on some platform,
        # fall back to a serial split (identical numerics).
        if num_splits > 1 and split_sem is not pltpu.ARBITRARY:
            psum = _call(pltpu.ARBITRARY)
        else:
            raise

    return jnp.sum(psum[:, 0]) if num_splits > 1 else psum[0, 0]


def dynamic_focal_key_loss(loss, k, old_k, has_old_k, *,
                           alpha=ALPHA, gamma=GAMMA,
                           min_pallas_bytes=_DEFAULT_MIN_PALLAS_BYTES):
    """DynamicFocalKeyLoss forward: returns (fl * mean(loss), updated EMA state, fl)."""
    loss = jnp.asarray(loss)
    k = jnp.asarray(k)

    loss_mean = _streaming_sum(loss, min_pallas_bytes=min_pallas_bytes) / loss.size
    k_mean = _streaming_sum(k, min_pallas_bytes=min_pallas_bytes) / k.size

    old_k = jnp.asarray(old_k, jnp.float32).reshape(())
    has_old_k = jnp.asarray(has_old_k).reshape(())
    new_k = jnp.where(has_old_k != 0, alpha * k_mean + (1.0 - alpha) * old_k, k_mean)

    one_minus_k = 1.0 - k_mean
    if float(gamma) == int(gamma):
        # Static integer gamma (the usual gamma=2): exact multiply chain, no exp/log pair.
        focal_pow = lax.integer_pow(one_minus_k, int(gamma))
    else:
        focal_pow = jnp.power(one_minus_k, gamma)
    fl = -focal_pow * jnp.log(k_mean)

    # TODO(synk): tensorboard add_scalar(k)/add_scalar(fl) logging side effects have no
    # Pallas equivalent; the values are returned instead.
    return fl * loss_mean, new_k, fl


def _reference(loss, k, old_k, has_old_k, alpha=ALPHA, gamma=GAMMA):
    loss_mean = jnp.mean(jnp.asarray(loss, jnp.float32))
    k_mean = jnp.mean(jnp.asarray(k, jnp.float32))
    new_k = jnp.where(has_old_k != 0, alpha * k_mean + (1.0 - alpha) * old_k, k_mean)
    fl = -(1.0 - k_mean) ** gamma * jnp.log(k_mean)
    return fl * loss_mean, new_k, fl


if __name__ == "__main__":
    key = jax.random.PRNGKey(0)
    k1, k2, k3, k4 = jax.random.split(key, 4)

    def check(got, want, rtol=1e-5, atol=1e-6):
        for g, w in zip(got, want):
            assert jnp.allclose(g, w, rtol=rtol, atol=atol), (g, w)

    # Per-element loss / KPI tensors from the wrapped loss_module (batch=32, 96 each).
    B, N = 32, 96
    loss = jax.random.uniform(k1, (B, N), jnp.float32, minval=0.1, maxval=3.0)
    kpi = jax.random.uniform(k2, (B, N), jnp.float32, minval=0.2, maxval=0.95)

    # Step 1 (EMA state None) and step 2 (EMA branch). Tiny inputs auto-route to the
    # plain-jnp fast path via the size-based dispatch.
    out0, new_k0, fl0 = dynamic_focal_key_loss(loss, kpi, 0.0, 0)
    out1, new_k1, fl1 = dynamic_focal_key_loss(loss, kpi, new_k0, 1)
    jax.block_until_ready((out0, out1))
    check((out0, new_k0, fl0), _reference(loss, kpi, 0.0, 0))
    check((out1, new_k1, fl1), _reference(loss, kpi, new_k0, 1))

    # Same tensors, forced through the Pallas streaming-sum kernel.
    outp, new_kp, flp = dynamic_focal_key_loss(loss, kpi, new_k0, 1, min_pallas_bytes=0)
    jax.block_until_ready(outp)
    check((outp, new_kp, flp), _reference(loss, kpi, new_k0, 1))

    # Native-bf16 inputs with a ragged row tile -> exercises in-kernel upcast + tail masking.
    loss_b = jax.random.uniform(k3, (300, 192), jnp.float32,
                                minval=0.1, maxval=3.0).astype(jnp.bfloat16)
    kpi_b = jax.random.uniform(k4, (300, 192), jnp.float32,
                               minval=0.2, maxval=0.95).astype(jnp.bfloat16)
    outb, new_kb, flb = dynamic_focal_key_loss(loss_b, kpi_b, new_k1, 1,
                                               min_pallas_bytes=0)
    jax.block_until_ready(outb)
    check((outb, new_kb, flb), _reference(loss_b, kpi_b, new_k1, 1), rtol=1e-4, atol=1e-5)

    # Shape with no 128-multiple factorization -> (rows, minor-dim) fallback tiling + mask.
    loss_o = jax.random.uniform(k1, (37, 100), jnp.float32, minval=0.1, maxval=3.0)
    kpi_o = jax.random.uniform(k2, (37, 100), jnp.float32, minval=0.2, maxval=0.95)
    outo, new_ko, flo = dynamic_focal_key_loss(loss_o, kpi_o, 0.0, 0, min_pallas_bytes=0)
    jax.block_until_ready(outo)
    check((outo, new_ko, flo), _reference(loss_o, kpi_o, 0.0, 0))

    print("KERNEL_OK")
</pallas_src>

<mosaic_0001>
module attributes {stable_mosaic.version = 11 : i64} {
  func.func @_sum_tiles_kernel(%arg0: i32, %arg1: i32, %arg2: memref<3x1024xf32, #tpu.memory_space<vmem>>, %arg3: memref<1x128xf32, #tpu.memory_space<vmem>>, %arg4: memref<3x1024xf32, #tpu.memory_space<vmem>>) attributes {dimension_semantics = [#tpu.dimension_semantics<arbitrary>, #tpu.dimension_semantics<arbitrary>], iteration_bounds = array<i64: 1, 1>, scalar_prefetch = 0 : i64, scratch_operands = 1 : i64, tpu.core_type = #tpu.core_type<tc>, window_params = [{transform_indices = @transform_0, window_bounds = array<i64: 3, 1024>}, {transform_indices = @transform_1, window_bounds = array<i64: 1, 128>}]} {
    %c0_i32 = arith.constant 0 : i32
    %0 = arith.cmpi eq, %arg1, %c0_i32 : i32
    %1 = arith.extui %0 : i1 to i32
    %c0_i32_0 = arith.constant 0 : i32
    %2 = arith.cmpi ne, %1, %c0_i32_0 : i32
    scf.if %2 {
      %cst = arith.constant 0.000000e+00 : f32
      %10 = vector.broadcast %cst : f32 to vector<3x1024xf32>
      %c0_8 = arith.constant 0 : index
      %c0_9 = arith.constant 0 : index
      %11 = vector.load %arg4[%c0_8, %c0_9] : memref<3x1024xf32, #tpu.memory_space<vmem>>, vector<3x1024xf32>
      tpu.vector_store %arg4[%c0_8, %c0_9], %10 {strides = array<i32>} : memref<3x1024xf32, #tpu.memory_space<vmem>>, vector<3x1024xf32>,
    } else {
    }
    %c0 = arith.constant 0 : index
    %c0_1 = arith.constant 0 : index
    %3 = vector.load %arg4[%c0, %c0_1] : memref<3x1024xf32, #tpu.memory_space<vmem>>, vector<3x1024xf32>
    %c0_2 = arith.constant 0 : index
    %c0_3 = arith.constant 0 : index
    %4 = vector.load %arg2[%c0_2, %c0_3] : memref<3x1024xf32, #tpu.memory_space<vmem>>, vector<3x1024xf32>
    %5 = arith.addf %3, %4 : vector<3x1024xf32>
    %c0_4 = arith.constant 0 : index
    %c0_5 = arith.constant 0 : index
    %6 = vector.load %arg4[%c0_4, %c0_5] : memref<3x1024xf32, #tpu.memory_space<vmem>>, vector<3x1024xf32>
    tpu.vector_store %arg4[%c0_4, %c0_5], %5 {strides = array<i32>} : memref<3x1024xf32, #tpu.memory_space<vmem>>, vector<3x1024xf32>,
    %c0_i32_6 = arith.constant 0 : i32
    %7 = arith.cmpi eq, %arg1, %c0_i32_6 : i32
    %8 = arith.extui %7 : i1 to i32
    %c0_i32_7 = arith.constant 0 : i32
    %9 = arith.cmpi ne, %8, %c0_i32_7 : i32
    scf.if %9 {
      %c0_8 = arith.constant 0 : index
      %c0_9 = arith.constant 0 : index
      %10 = vector.load %arg4[%c0_8, %c0_9] : memref<3x1024xf32, #tpu.memory_space<vmem>>, vector<3x1024xf32>
      %11 = vector.shape_cast %10 : vector<3x1024xf32> to vector<1x3x1024xf32>
      %cst = arith.constant dense<0.000000e+00> : vector<1xf32>
      %12 = vector.multi_reduction <add>, %11, %cst [1, 2] : vector<1x3x1024xf32> to vector<1xf32>
      %13 = vector.shape_cast %12 : vector<1xf32> to vector<1x1x1xf32>
      %14 = vector.extract %13[0, 0, 0] : f32 from vector<1x1x1xf32>
      %15 = vector.broadcast %14 : f32 to vector<1x1xf32>
      %16 = vector.shape_cast %15 : vector<1x1xf32> to vector<1x1xf32>
      %17 = vector.broadcast %16 : vector<1x1xf32> to vector<1x128xf32>
      %c0_10 = arith.constant 0 : index
      %c0_11 = arith.constant 0 : index
      %18 = vector.load %arg3[%c0_10, %c0_11] : memref<1x128xf32, #tpu.memory_space<vmem>>, vector<1x128xf32>
      tpu.vector_store %arg3[%c0_10, %c0_11], %17 {strides = array<i32>} : memref<1x128xf32, #tpu.memory_space<vmem>>, vector<1x128xf32>,
    } else {
    }
    return
  }
  func.func @transform_0(%arg0: i32, %arg1: i32) -> (i32, i32) {
    %c1_i32 = arith.constant 1 : i32
    %0 = arith.muli %arg0, %c1_i32 : i32
    %1 = arith.addi %0, %arg1 : i32
    %c0_i32 = arith.constant 0 : i32
    %c0_i32_0 = arith.constant 0 : i32
    return %1, %c0_i32 : i32, i32
  }
  func.func @transform_1(%arg0: i32, %arg1: i32) -> (i32, i32) {
    %c0_i32 = arith.constant 0 : i32
    %c0_i32_0 = arith.constant 0 : i32
    return %arg0, %c0_i32 : i32, i32
  }
}

</mosaic_0001>

<llo_original>
// kernel: tpu_custom_call.1
$region0: #{tpu_custom_call.1}
  #allocation0 [shape = 'u32[]', space=smem, size = 0x4, offset = 0x4, fixed_abs, tag = 'smem constant byte address 0x4 - core index']
  #allocation1 [shape = 'u32[144,128]{1,0:T(1,128)}', space=vmem, size = 0x12000, scoped, tag = 'internal scratch']
  #allocation2 [shape = 'f32[3,1024]{1,0:T(4,128)}', space=vmem, size = 0x4000, scoped, tag = 'scratch operand']
  %s0 = inlined_call_operand.hbm [shape: f32[3,1024], index: 0, kind: input, shape index: {}]
  %s1 = inlined_call_operand.hbm [shape: f32[1,128], index: 1, kind: output, shape index: {}]
  %s2 = sld [smem:[#allocation0]]
  $region26: #{tpu_custom_call.1} parent=0
    _
  %s4 = ssub.s32 1, %s2
  %s5 = scalar_select 0, %s4, %s2
  $region1: #{tpu_custom_call.1} parent=0
    #allocation3 [shape = 'u8[16384]{0}', space=vmem, size = 0x4000, scoped, tag = 'input window, operand 0, single buffered']
    #allocation4 [shape = 's32[1]{0}', space=sflag, size = 0x4, scoped, tag = 'scoped memory for tpu_custom_call.1']
    #allocation5 [shape = 's32[1]{0}', space=sflag, size = 0x4, scoped, tag = 'scoped memory for tpu_custom_call.1']
    #allocation6 [shape = 'u8[512]{0}', space=vmem, size = 0x400, scoped, tag = 'output window, operand 0, single buffered']
    %6 = vsyncpa [#allocation4], 0
    %7 = vsyncpa [#allocation5], 0
    // Predicated region
    $region2: #{tpu_custom_call.1} parent=1 // pred_check
      _
    $region3: #{tpu_custom_call.1} parent=1 // pred_check_branch
      %9 = sbr.rel (0) target = $region5
    $region4: #{tpu_custom_call.1} parent=1 // pred_region
      %s10 = sadd.s32 0, 0
      %s12 = ssub.s32 512, 512
      %13 = vsyncadd [#allocation4], %s12
      %s14 = smul.addr %s10, 8
      %s15 = smul.addr %s14, 64
      %s16 = scalar_lea.hbm %s0, %s15
      %s18 = sshll.u32 [#allocation3], 4
      %s19 = int_to_ptr.vmem [resolvable:$true] %s18
      %21 = dma.hbm_to_vmem [thread:$0]  %s16, 512, %s19, [#allocation4]
    $region5: #{tpu_custom_call.1} parent=1 // pred_fallthru
      _
    // Predicated region
    $region6: #{tpu_custom_call.1} parent=1 // pred_check
      _
    $region7: #{tpu_custom_call.1} parent=1 // pred_check_branch
      %23 = sbr.rel (0) target = $region9
    $region8: #{tpu_custom_call.1} parent=1 // pred_region
      %24 = dma.done [#allocation4], 512
    $region9: #{tpu_custom_call.1} parent=1 // pred_fallthru
      _
    %s25 = sadd.s32 0, 0
    %p26 = scmp.eq.s32.totalorder 0, 0
    // Predicated region
    $region10: #{tpu_custom_call.1} parent=1 // pred_check
      %p27 = pneg %p26
    $region11: #{tpu_custom_call.1} parent=1 // pred_check_branch
      %29 = sbr.rel (%p27) target = $region13
    $region12: #{tpu_custom_call.1} parent=1 // pred_region
      %30 = vst [vmem:[#allocation2] sm:$0x77] 0.0
      %31 = vst [vmem:[#allocation2 + $0x8] sm:$0x77] 0.0
      %32 = vst [vmem:[#allocation2 + $0x10] sm:$0x77] 0.0
      %33 = vst [vmem:[#allocation2 + $0x18] sm:$0x77] 0.0
    $region13: #{tpu_custom_call.1} parent=1 // pred_fallthru
      _
    %v34 = vld [vmem:[#allocation2] sm:$0x77]
    %v35 = vld [vmem:[#allocation2 + $0x8] sm:$0x77]
    %v36 = vld [vmem:[#allocation2 + $0x10] sm:$0x77]
    %v37 = vld [vmem:[#allocation2 + $0x18] sm:$0x77]
    %v38 = vld [vmem:[#allocation3] sm:$0x77]
    %v39 = vld [vmem:[#allocation3 + $0x8] sm:$0x77]
    %v40 = vld [vmem:[#allocation3 + $0x10] sm:$0x77]
    %v41 = vld [vmem:[#allocation3 + $0x18] sm:$0x77]
    %v42 = vadd.f32 %v34, %v38
    %v43 = vadd.f32 %v35, %v39
    %v44 = vadd.f32 %v36, %v40
    %v45 = vadd.f32 %v37, %v41
    %46 = vst [vmem:[#allocation2] sm:$0x77] %v42
    %47 = vst [vmem:[#allocation2 + $0x8] sm:$0x77] %v43
    %48 = vst [vmem:[#allocation2 + $0x10] sm:$0x77] %v44
    %49 = vst [vmem:[#allocation2 + $0x18] sm:$0x77] %v45
    // Predicated region
    $region14: #{tpu_custom_call.1} parent=1 // pred_check
      %p50 = pneg %p26
    $region15: #{tpu_custom_call.1} parent=1 // pred_check_branch
      %52 = sbr.rel (%p50) target = $region17
    $region16: #{tpu_custom_call.1} parent=1 // pred_region
      %v53 = vld [vmem:[#allocation2] sm:$0x77]
      %v54 = vld [vmem:[#allocation2 + $0x8] sm:$0x77]
      %v55 = vld [vmem:[#allocation2 + $0x10] sm:$0x77]
      %v56 = vld [vmem:[#allocation2 + $0x18] sm:$0x77]
      %v61 = vcombine.high %v53, %v53
      %v62 = vcombine.high %v54, %v54
      %v63 = vcombine.high %v55, %v55
      %v64 = vcombine.high %v56, %v56
      %vm69 = vcmask 1042432
      %v70 = vsel %vm69, %v53, 0.0
      %v71 = vsel %vm69, %v61, 0.0
      %v72 = vadd.f32 %v70, %v71
      %v73 = vsel %vm69, %v54, 0.0
      %v74 = vadd.f32 %v72, %v73
      %v75 = vsel %vm69, %v62, 0.0
      %v76 = vadd.f32 %v74, %v75
      %v77 = vsel %vm69, %v55, 0.0
      %v78 = vadd.f32 %v76, %v77
      %v79 = vsel %vm69, %v63, 0.0
      %v80 = vadd.f32 %v78, %v79
      %v81 = vsel %vm69, %v56, 0.0
      %v82 = vadd.f32 %v80, %v81
      %v83 = vsel %vm69, %v64, 0.0
      %v84 = vadd.f32 %v82, %v83
      %85 = vadd.xlane.f32.xlu0 %v84
      %v86 = vpop.xlane.xlu0 %85
      %v87 = vrot.slane %v86, 4
      %v88 = vadd.f32 %v86, %v87
      %v89 = vrot.slane %v88, 2
      %v90 = vadd.f32 %v88, %v89
      %v91 = vrot.slane %v90, 1
      %v92 = vadd.f32 %v90, %v91
      %s93 = vtos %v92
      %v94 = vstv %s93
      %95 = vst [vmem:[#allocation6] sm:$0x1] %v94
    $region17: #{tpu_custom_call.1} parent=1 // pred_fallthru
      _
    // Predicated region
    $region18: #{tpu_custom_call.1} parent=1 // pred_check
      _
    $region19: #{tpu_custom_call.1} parent=1 // pred_check_branch
      %97 = sbr.rel (0) target = $region21
    $region20: #{tpu_custom_call.1} parent=1 // pred_region
      %s99 = ssub.s32 16, 16
      %100 = vsyncadd [#allocation5], %s99
      %s102 = sshll.u32 [#allocation6], 4
      %s103 = int_to_ptr.vmem [resolvable:$true] %s102
      %105 = dma.vmem_to_hbm [thread:$0]  %s103, 16, %s1, [#allocation5]
    $region21: #{tpu_custom_call.1} parent=1 // pred_fallthru
      _
    // Predicated region
    $region22: #{tpu_custom_call.1} parent=1 // pred_check
      _
    $region23: #{tpu_custom_call.1} parent=1 // pred_check_branch
      %107 = sbr.rel (0) target = $region25
    $region24: #{tpu_custom_call.1} parent=1 // pred_region
      %108 = dma.done [#allocation5], 16
    $region25: #{tpu_custom_call.1} parent=1 // pred_fallthru
      _
    %109 = vsyncpa [#allocation4], 1
    %110 = vsyncpa [#allocation5], 1

</llo_original>
